<compile_context>
chip_gen: v7x
topology: tpu7x:2x2x1
jax: 0.10.0
libtpu: 0.0.40
codegen_flags: <defaults>
</compile_context>

<pallas_src>
import jax
import jax.numpy as jnp
from jax.experimental import pallas as pl
from jax.experimental.pallas import tpu as pltpu


# ----------------------------------------------------------------------------
# Kernel 1: fused q/k/v/f_all projection (single MXU matmul).
# ----------------------------------------------------------------------------
def proj_kernel(x_ref, w_ref, b_ref, o_ref):
    # x_ref: (1, C, S); w_ref: (3C + kc2*hd, C); b_ref: (3C + kc2*hd, 1)
    # o_ref: (1, 3C + kc2*hd, S)   rows = [q ; k ; v ; f_all]
    x = x_ref[0].astype(jnp.float32)
    acc = jnp.dot(w_ref[...].astype(jnp.float32), x,
                  preferred_element_type=jnp.float32)
    o_ref[0] = (acc + b_ref[...].astype(jnp.float32)).astype(o_ref.dtype)


# ----------------------------------------------------------------------------
# Kernel 2: 7x7 windowed attention on a reflect-padded halo tile.
# Online softmax over the 49 taps; taps are static lane-offset slices of the
# flattened (Hp*Wp) padded tile; output lives on a width-Wp canvas.
# ----------------------------------------------------------------------------
def make_attn_kernel(hd, L, Wp, kernel_att, scale):
    taps = [(ki, kj) for ki in range(kernel_att) for kj in range(kernel_att)]

    def attn_kernel(q_ref, k_ref, v_ref, o_ref):
        # q_ref: (1,1,hd,L); k_ref/v_ref: (1,1,hd,Hp*Wp); o_ref: (1,1,hd,L)
        q = q_ref[0, 0].astype(jnp.float32) * scale            # (hd, L)
        m = jnp.full((1, L), -jnp.inf, jnp.float32)
        l = jnp.zeros((1, L), jnp.float32)
        acc = jnp.zeros((hd, L), jnp.float32)
        for ki, kj in taps:                                     # 49 static windows
            off = ki * Wp + kj
            kw = k_ref[0, 0, :, pl.ds(off, L)].astype(jnp.float32)   # (hd, L)
            vw = v_ref[0, 0, :, pl.ds(off, L)].astype(jnp.float32)   # (hd, L)
            s = jnp.sum(q * kw, axis=0, keepdims=True)          # (1, L) logits
            m_new = jnp.maximum(m, s)
            alpha = jnp.exp(m - m_new)
            p_tap = jnp.exp(s - m_new)
            l = alpha * l + p_tap
            acc = alpha * acc + p_tap * vw
            m = m_new
        inv = pl.reciprocal(l, approx=False)                    # (1, L)
        o_ref[0, 0] = (acc * inv).astype(o_ref.dtype)

    return attn_kernel


# ----------------------------------------------------------------------------
# Kernel 3: grouped 3x3 dep_conv as 9 block-diagonal MXU matmuls over shifted
# windows of the zero-padded f_all tile, fused with the rate1/rate2 combine.
# ----------------------------------------------------------------------------
def make_combine_kernel(L, Wp, kernel_conv):
    taps = [(ki, kj) for ki in range(kernel_conv) for kj in range(kernel_conv)]

    def combine_kernel(att_ref, f_ref, w_ref, rates_ref, o_ref):
        # att_ref: (1, C, L); f_ref: (1, kc2*hd, Hc*Wp); w_ref: (kc2, C, kc2*hd)
        # rates_ref: (2,) SMEM (rate1, rate2); o_ref: (1, C, L)
        C = o_ref.shape[1]
        conv = jnp.zeros((C, L), jnp.float32)
        for t, (ki, kj) in enumerate(taps):                     # 9 shifted matmuls
            off = ki * Wp + kj
            win = f_ref[0, :, pl.ds(off, L)].astype(jnp.float32)     # (kc2*hd, L)
            conv = conv + jnp.dot(w_ref[t].astype(jnp.float32), win,
                                  preferred_element_type=jnp.float32)
        att = att_ref[0].astype(jnp.float32)
        o_ref[0] = (rates_ref[0] * att + rates_ref[1] * conv).astype(o_ref.dtype)

    return combine_kernel


# ----------------------------------------------------------------------------
# Plain-JAX glue (data movement / parameter-only work).
# ----------------------------------------------------------------------------
def _unfold_reflect(t, ka, pad, H, W):
    """(..., H, W) -> (..., ka*ka, H, W): reflection pad + im2col (reference only)."""
    tp = jnp.pad(t, [(0, 0)] * (t.ndim - 2) + [(pad, pad), (pad, pad)],
                 mode="reflect")
    wins = [tp[..., i:i + H, j:j + W] for i in range(ka) for j in range(ka)]
    return jnp.stack(wins, axis=-3)


def _position_encoding(H, W, wp, bp):
    """pe = conv_p(position(H, W)) -> (head_dim, H, W)."""
    loc_w = jnp.linspace(-1.0, 1.0, W, dtype=jnp.float32)
    loc_h = jnp.linspace(-1.0, 1.0, H, dtype=jnp.float32)
    loc = jnp.stack([jnp.tile(loc_w[None, :], (H, 1)),
                     jnp.tile(loc_h[:, None], (1, W))], axis=0)        # (2, H, W)
    return (jnp.einsum("dc,chw->dhw", wp, loc,
                       precision=jax.lax.Precision.HIGHEST)
            + bp[:, None, None])


# ----------------------------------------------------------------------------
# Forward wrapper.
# ----------------------------------------------------------------------------
def acmix_forward(x, p, head=4, kernel_att=7, kernel_conv=3):
    """Pallas forward for ACmix with stride=1, dilation=1 (module defaults)."""
    B, C, H, W = x.shape
    hd = C // head
    S = H * W
    kc2 = kernel_conv * kernel_conv
    dtype = x.dtype
    hp = jax.lax.Precision.HIGHEST

    pad_att = (kernel_att - 1) // 2            # dilation == 1
    pad_c = (kernel_conv - 1) // 2
    Wp = W + 2 * pad_att                       # shared canvas row stride
    Hp = H + 2 * pad_att
    Hc = H + 2 * pad_c
    P_att = Hp * Wp
    P_cnv = Hc * Wp
    L = (H - 1) * Wp + W                       # canvas length covering all (i, j<W)
    scale = float(hd) ** -0.5
    M = 3 * C + kc2 * hd

    # ------- host: fold the `fc` 1x1 conv into the projection weights ---------
    wqkv = jnp.concatenate([p["w1"], p["w2"], p["w3"]], axis=0).astype(jnp.float32)
    bqkv = jnp.concatenate([p["b1"], p["b2"], p["b3"]], axis=0).astype(jnp.float32)
    wfc = p["wfc"].astype(jnp.float32)                                 # (kc2, 3*head)
    w_fall = jnp.einsum("mg,gdc->mdc", wfc, wqkv.reshape(3 * head, hd, C),
                        precision=hp).reshape(kc2 * hd, C)
    b_fall = jnp.einsum("mg,gd->md", wfc, bqkv.reshape(3 * head, hd),
                        precision=hp).reshape(kc2 * hd)
    w_big = jnp.concatenate([wqkv, w_fall], axis=0)                    # (M, C)
    b_big = jnp.concatenate([bqkv, b_fall], axis=0)[:, None]           # (M, 1)

    # ------- stage 1: fused q/k/v/f_all projection (Pallas) -------------------
    proj = pl.pallas_call(
        proj_kernel,
        out_shape=jax.ShapeDtypeStruct((B, M, S), dtype),
        grid_spec=pltpu.PrefetchScalarGridSpec(
            num_scalar_prefetch=0,
            grid=(B,),
            in_specs=[
                pl.BlockSpec((1, C, S), lambda b: (b, 0, 0)),
                pl.BlockSpec((M, C), lambda b: (0, 0)),
                pl.BlockSpec((M, 1), lambda b: (0, 0)),
            ],
            out_specs=pl.BlockSpec((1, M, S), lambda b: (b, 0, 0)),
        ),
        compiler_params=pltpu.CompilerParams(dimension_semantics=("parallel",)),
    )(x.reshape(B, C, S), w_big, b_big)

    q = proj[:, :C]                            # (B, C, S)
    k = proj[:, C:2 * C]
    v = proj[:, 2 * C:3 * C]
    f_all = proj[:, 3 * C:]                    # (B, kc2*hd, S), rows = m*hd + d

    # ------- glue: fold pe into k; build reflect-padded halo tiles ------------
    pe = _position_encoding(H, W, p["wp"].astype(jnp.float32),
                            p["bp"].astype(jnp.float32))               # (hd, H, W)
    # unfold(pad(k)) - unfold(pad(pe)) == unfold(pad(k - pe)); the remaining
    # sum_d q*pe term is constant over the 49 taps and cancels in softmax.
    k_eff = k.reshape(B, head, hd, H, W).astype(jnp.float32) - pe[None, None]
    v_sp = v.reshape(B, head, hd, H, W)
    pad_hw = [(0, 0)] * 3 + [(pad_att, pad_att), (pad_att, pad_att)]
    k_pad = jnp.pad(k_eff, pad_hw, mode="reflect").reshape(B, head, hd, P_att)
    v_pad = jnp.pad(v_sp, pad_hw, mode="reflect").reshape(B, head, hd, P_att)
    q_cv = jnp.pad(q.reshape(B, head, hd, H, W),
                   [(0, 0)] * 4 + [(0, Wp - W)]
                   ).reshape(B, head, hd, H * Wp)[..., :L]

    # ------- stage 2: 7x7 windowed attention (Pallas) -------------------------
    attn_kernel = make_attn_kernel(hd, L, Wp, kernel_att, scale)
    out_att = pl.pallas_call(
        attn_kernel,
        out_shape=jax.ShapeDtypeStruct((B, head, hd, L), dtype),
        grid_spec=pltpu.PrefetchScalarGridSpec(
            num_scalar_prefetch=0,
            grid=(B, head),
            in_specs=[
                pl.BlockSpec((1, 1, hd, L), lambda b, h: (b, h, 0, 0)),
                pl.BlockSpec((1, 1, hd, P_att), lambda b, h: (b, h, 0, 0)),
                pl.BlockSpec((1, 1, hd, P_att), lambda b, h: (b, h, 0, 0)),
            ],
            out_specs=pl.BlockSpec((1, 1, hd, L), lambda b, h: (b, h, 0, 0)),
        ),
        compiler_params=pltpu.CompilerParams(
            dimension_semantics=("parallel", "parallel")),
    )(q_cv, k_pad, v_pad)

    # ------- glue: zero-pad f_all onto the same canvas; block-diag weights ----
    f_pad = jnp.pad(f_all.reshape(B, kc2, hd, H, W),
                    [(0, 0)] * 3 + [(pad_c, pad_c), (pad_c, Wp - W - pad_c)]
                    ).reshape(B, kc2 * hd, P_cnv)
    wdep_t = p["wdep"].astype(jnp.float32).reshape(C, kc2, kc2)        # (C, m, tap)
    onehot = (jnp.arange(hd)[None, :] == (jnp.arange(C) // head)[:, None]
              ).astype(jnp.float32)                                    # (C, hd)
    w_blk = jnp.einsum("cmt,cd->tcmd", wdep_t, onehot,
                       precision=hp).reshape(kc2, C, kc2 * hd)
    att_cv = out_att.reshape(B, C, L)
    rates = jnp.stack([p["rate1"], p["rate2"]]).astype(jnp.float32)

    # ------- stage 3: grouped dep_conv + rate combine (Pallas) ----------------
    combine_kernel = make_combine_kernel(L, Wp, kernel_conv)
    out_cv = pl.pallas_call(
        combine_kernel,
        out_shape=jax.ShapeDtypeStruct((B, C, L), dtype),
        grid_spec=pltpu.PrefetchScalarGridSpec(
            num_scalar_prefetch=0,
            grid=(B,),
            in_specs=[
                pl.BlockSpec((1, C, L), lambda b: (b, 0, 0)),
                pl.BlockSpec((1, kc2 * hd, P_cnv), lambda b: (b, 0, 0)),
                pl.BlockSpec((kc2, C, kc2 * hd), lambda b: (0, 0, 0)),
                pl.BlockSpec(memory_space=pltpu.MemorySpace.SMEM),
            ],
            out_specs=pl.BlockSpec((1, C, L), lambda b: (b, 0, 0)),
        ),
        compiler_params=pltpu.CompilerParams(dimension_semantics=("parallel",)),
    )(att_cv, f_pad, w_blk, rates)

    # ------- glue: canvas (row stride Wp) -> dense (B, C, H, W) ---------------
    out = jnp.pad(out_cv, [(0, 0), (0, 0), (0, H * Wp - L)]
                  ).reshape(B, C, H, Wp)[..., :W]
    return out


# ----------------------------------------------------------------------------
# Pure-JAX reference mirroring the PyTorch forward (stride=1, dilation=1).
# ----------------------------------------------------------------------------
def acmix_reference(x, p, head=4, kernel_att=7, kernel_conv=3):
    B, C, H, W = x.shape
    hd = C // head
    scaling = float(hd) ** -0.5
    hp = jax.lax.Precision.HIGHEST
    pad_att = (kernel_att - 1) // 2
    pad_c = (kernel_conv - 1) // 2

    def conv1x1(t, w, b):
        return jnp.einsum("oc,bchw->bohw", w, t, precision=hp) + b[None, :, None, None]

    q = conv1x1(x, p["w1"], p["b1"])
    k = conv1x1(x, p["w2"], p["b2"])
    v = conv1x1(x, p["w3"], p["b3"])

    pe = _position_encoding(H, W, p["wp"], p["bp"])                    # (hd, H, W)

    q_att = q.reshape(B, head, hd, H, W) * scaling
    k_att = k.reshape(B, head, hd, H, W)
    v_att = v.reshape(B, head, hd, H, W)

    unf_k = _unfold_reflect(k_att, kernel_att, pad_att, H, W)          # (B,h,hd,49,H,W)
    unf_v = _unfold_reflect(v_att, kernel_att, pad_att, H, W)
    unf_rpe = _unfold_reflect(pe, kernel_att, pad_att, H, W)           # (hd,49,H,W)

    att = jnp.sum(q_att[:, :, :, None]
                  * (unf_k + pe[None, None, :, None] - unf_rpe[None, None]), axis=2)
    att = jax.nn.softmax(att, axis=2)                                  # over 49 taps
    out_att = jnp.sum(att[:, :, None] * unf_v, axis=3).reshape(B, C, H, W)

    cat = jnp.concatenate([q.reshape(B, head, hd, H * W),
                           k.reshape(B, head, hd, H * W),
                           v.reshape(B, head, hd, H * W)], axis=1)     # (B,3h,hd,HW)
    f_all = jnp.einsum("mg,bgds->bmds", p["wfc"], cat, precision=hp)   # (B,kc2,hd,HW)
    f_conv = jnp.transpose(f_all, (0, 2, 1, 3)).reshape(
        B, hd * kernel_conv * kernel_conv, H, W)
    out_conv = jax.lax.conv_general_dilated(
        f_conv, p["wdep"], window_strides=(1, 1),
        padding=((pad_c, pad_c), (pad_c, pad_c)),
        dimension_numbers=("NCHW", "OIHW", "NCHW"),
        feature_group_count=hd, precision=hp)
    return p["rate1"] * out_att + p["rate2"] * out_conv


if __name__ == "__main__":
    key = jax.random.PRNGKey(0)
    keys = jax.random.split(key, 12)

    B, C, H, W = 2, 8, 16, 16
    head, kernel_att, kernel_conv = 4, 7, 3
    hd = C // head

    x = jax.random.normal(keys[0], (B, C, H, W), dtype=jnp.float32)
    sc = 1.0 / (C ** 0.5)
    params = dict(
        w1=jax.random.normal(keys[1], (C, C), jnp.float32) * sc,
        b1=jax.random.normal(keys[2], (C,), jnp.float32) * 0.1,
        w2=jax.random.normal(keys[3], (C, C), jnp.float32) * sc,
        b2=jax.random.normal(keys[4], (C,), jnp.float32) * 0.1,
        w3=jax.random.normal(keys[5], (C, C), jnp.float32) * sc,
        b3=jax.random.normal(keys[6], (C,), jnp.float32) * 0.1,
        wp=jax.random.normal(keys[7], (hd, 2), jnp.float32) * 0.5,
        bp=jax.random.normal(keys[8], (hd,), jnp.float32) * 0.1,
        wfc=jax.random.normal(keys[9], (kernel_conv ** 2, 3 * head),
                              jnp.float32) * (1.0 / (3 * head) ** 0.5),
        rate1=jnp.float32(0.5),   # init_rate_half
        rate2=jnp.float32(0.5),
    )
    # dep_conv weight: module's shift-identity init (+ small perturbation so the
    # general grouped-conv path is actually exercised); bias is None in the module.
    kc2 = kernel_conv ** 2
    idx = jnp.arange(kc2)
    eye = jnp.zeros((kc2, kernel_conv, kernel_conv), jnp.float32).at[
        idx, idx // kernel_conv, idx % kernel_conv].set(1.0)
    wdep = jnp.tile(eye[None], (C, 1, 1, 1))
    wdep = wdep + 0.1 * jax.random.normal(keys[10], wdep.shape, jnp.float32)
    params["wdep"] = wdep

    out = acmix_forward(x, params, head=head,
                        kernel_att=kernel_att, kernel_conv=kernel_conv)
    out = jax.block_until_ready(out)
    assert out.shape == x.shape and out.dtype == x.dtype

    ref = acmix_reference(x, params, head=head,
                          kernel_att=kernel_att, kernel_conv=kernel_conv)
    ref = jax.block_until_ready(ref)
    max_err = float(jnp.max(jnp.abs(out - ref)))
    assert jnp.allclose(out, ref, atol=2e-4, rtol=2e-4), f"mismatch, max_err={max_err}"

    print("KERNEL_OK")
</pallas_src>

<mosaic_0001>
module attributes {stable_mosaic.version = 11 : i64} {
  func.func @proj_kernel(%arg0: i32, %arg1: memref<1x8x256xf32, #tpu.memory_space<vmem>>, %arg2: memref<42x8xf32, #tpu.memory_space<vmem>>, %arg3: memref<42x1xf32, #tpu.memory_space<vmem>>, %arg4: memref<1x42x256xf32, #tpu.memory_space<vmem>>) attributes {dimension_semantics = [#tpu.dimension_semantics<parallel>], iteration_bounds = array<i64: 2>, scalar_prefetch = 0 : i64, scratch_operands = 0 : i64, tpu.core_type = #tpu.core_type<tc>, window_params = [{transform_indices = @transform_0, window_bounds = array<i64: 1, 8, 256>}, {pipeline_mode = #tpu.pipeline_mode<synchronous>, transform_indices = @transform_1, window_bounds = array<i64: 42, 8>}, {pipeline_mode = #tpu.pipeline_mode<synchronous>, transform_indices = @transform_2, window_bounds = array<i64: 42, 1>}, {transform_indices = @transform_3, window_bounds = array<i64: 1, 42, 256>}]} {
    %c0 = arith.constant 0 : index
    %c0_0 = arith.constant 0 : index
    %c0_1 = arith.constant 0 : index
    %0 = vector.load %arg1[%c0, %c0_0, %c0_1] : memref<1x8x256xf32, #tpu.memory_space<vmem>>, vector<1x8x256xf32>
    %1 = vector.shape_cast %0 : vector<1x8x256xf32> to vector<8x256xf32>
    %c0_2 = arith.constant 0 : index
    %c0_3 = arith.constant 0 : index
    %2 = vector.load %arg2[%c0_2, %c0_3] : memref<42x8xf32, #tpu.memory_space<vmem>>, vector<42x8xf32>
    %cst = arith.constant dense<0.000000e+00> : vector<42x256xf32>
    %3 = tpu.matmul %2, %1, %cst {dimension_numbers = #tpu.dot_dimension_numbers<[1], [0], [0], [1], [0, 0, 1, 1], [], []>} : vector<42x8xf32>, vector<8x256xf32>, vector<42x256xf32> -> vector<42x256xf32>
    %c0_4 = arith.constant 0 : index
    %c0_5 = arith.constant 0 : index
    %4 = vector.load %arg3[%c0_4, %c0_5] : memref<42x1xf32, #tpu.memory_space<vmem>>, vector<42x1xf32>
    %5 = vector.broadcast %4 : vector<42x1xf32> to vector<42x256xf32>
    %6 = arith.addf %3, %5 : vector<42x256xf32>
    %c0_6 = arith.constant 0 : index
    %c0_7 = arith.constant 0 : index
    %c0_8 = arith.constant 0 : index
    %7 = vector.load %arg4[%c0_6, %c0_7, %c0_8] : memref<1x42x256xf32, #tpu.memory_space<vmem>>, vector<1x42x256xf32>
    %8 = vector.shape_cast %7 : vector<1x42x256xf32> to vector<42x256xf32>
    %9 = vector.shape_cast %6 : vector<42x256xf32> to vector<1x42x256xf32>
    tpu.vector_store %arg4[%c0_6, %c0_7, %c0_8], %9 {strides = array<i32>} : memref<1x42x256xf32, #tpu.memory_space<vmem>>, vector<1x42x256xf32>,
    return
  }
  func.func @transform_0(%arg0: i32) -> (i32, i32, i32) {
    %c0_i32 = arith.constant 0 : i32
    %c0_i32_0 = arith.constant 0 : i32
    %c0_i32_1 = arith.constant 0 : i32
    return %arg0, %c0_i32, %c0_i32_0 : i32, i32, i32
  }
  func.func @transform_1(%arg0: i32) -> (i32, i32) {
    %c0_i32 = arith.constant 0 : i32
    %c0_i32_0 = arith.constant 0 : i32
    %c0_i32_1 = arith.constant 0 : i32
    return %c0_i32, %c0_i32_0 : i32, i32
  }
  func.func @transform_2(%arg0: i32) -> (i32, i32) {
    %c0_i32 = arith.constant 0 : i32
    %c0_i32_0 = arith.constant 0 : i32
    %c0_i32_1 = arith.constant 0 : i32
    return %c0_i32, %c0_i32_0 : i32, i32
  }
  func.func @transform_3(%arg0: i32) -> (i32, i32, i32) {
    %c0_i32 = arith.constant 0 : i32
    %c0_i32_0 = arith.constant 0 : i32
    %c0_i32_1 = arith.constant 0 : i32
    return %arg0, %c0_i32, %c0_i32_0 : i32, i32, i32
  }
}

</mosaic_0001>

<llo_original>
// kernel: tpu_custom_call.1
$region0: #{tpu_custom_call.1}
  #allocation0 [shape = 'u32[]', space=smem, size = 0x4, offset = 0x4, fixed_abs, tag = 'smem constant byte address 0x4 - core index']
  #allocation1 [shape = 'u32[144,128]{1,0:T(1,128)}', space=vmem, size = 0x12000, scoped, tag = 'internal scratch']
  %s0 = inlined_call_operand.vmem [shape: f32[2,8,256], index: 0, kind: input, shape index: {}]
  %s1 = inlined_call_operand.vmem [shape: f32[42,8], index: 1, kind: input, shape index: {}]
  %s2 = inlined_call_operand.vmem [shape: f32[42,1], index: 2, kind: input, shape index: {}]
  %s3 = inlined_call_operand.vmem [shape: f32[2,42,256], index: 3, kind: output, shape index: {}]
  %s4 = sld [smem:[#allocation0]]
  $region45: #{tpu_custom_call.1} parent=0
    _
  %s6 = ssub.s32 1, %s4
  %s7 = scalar_select 0, %s6, %s4
  loop: start=0, step=1, limit=4
  $region2: #{tpu_custom_call.1} parent=0 // loop_pre_header
    _
  $region3: #{tpu_custom_call.1} parent=0 // loop_header
    %s9 = sphi 0, %s13
    %p10 = scmp.ge.s32.totalorder %s9, 4
    %s19 = sphi 0, %s21
    %s22 = sphi 0, %s19
    %s23 = sphi 0, %s22
    %s39 = sphi 0, %s23
    %s43 = sphi 0, %s43
    %s45 = sphi 0, %s43
    %s46 = sphi 0, %s45
    %s60 = sphi 0, %s46
    %s64 = sphi 0, %s64
    %s66 = sphi 0, %s64
    %s67 = sphi 0, %s66
    %s81 = sphi 0, %s67
    %s87 = sphi 0, %s89
    %s90 = sphi 0, %s87
    %s91 = sphi 0, %s90
    %s107 = sphi 0, %s91
  $region4: #{tpu_custom_call.1} parent=0 // loop_header_branch
    %12 = sbr.rel (%p10) target = $region8
  $region5: #{tpu_custom_call.1} parent=0 // loop_body
    %s14 = ssub.s32 %s9, 1
    %s15 = ssub.s32 %s9, 2
    %s16 = sadd.s32 %s9, 1
    %s17 = ssub.s32 %s9, %s16
    %p18 = scmp.eq.s32.totalorder %s17, 0
    %s20 = sadd.s32 %s19, 1
    %s21 = scalar_select %p18, %s19, %s20
    %p24 = pneg %p18
    %p25 = scmp.eq.s32.totalorder %s9, 1
    %p26 = por %p24, %p25
    %p27 = scmp.ne.s32.totalorder %s19, %s22
    %p28 = scmp.eq.s32.totalorder %s9, 0
    %p29 = por %p27, %p28
    %p30 = scmp.ne.s32.totalorder %s19, %s22
    %p31 = scmp.eq.s32.totalorder %s14, 1
    %p32 = por %p30, %p31
    %p33 = scmp.ne.s32.totalorder %s22, %s23
    %p34 = scmp.eq.s32.totalorder %s14, 0
    %p35 = por %p33, %p34
    %p36 = scmp.ne.s32.totalorder %s22, %s23
    %p37 = scmp.eq.s32.totalorder %s15, 1
    %p38 = por %p36, %p37
    %p40 = scmp.ne.s32.totalorder %s23, %s39
    %p41 = scmp.eq.s32.totalorder %s15, 0
    %p42 = por %p40, %p41
    %s44 = sadd.s32 %s43, 1
    %p47 = scmp.eq.s32.totalorder %s9, 1
    %p48 = scmp.ne.s32.totalorder %s43, %s45
    %p49 = scmp.eq.s32.totalorder %s9, 0
    %p50 = por %p48, %p49
    %p51 = scmp.ne.s32.totalorder %s43, %s45
    %p52 = scmp.eq.s32.totalorder %s14, 1
    %p53 = por %p51, %p52
    %p54 = scmp.ne.s32.totalorder %s45, %s46
    %p55 = scmp.eq.s32.totalorder %s14, 0
    %p56 = por %p54, %p55
    %p57 = scmp.ne.s32.totalorder %s45, %s46
    %p58 = scmp.eq.s32.totalorder %s15, 1
    %p59 = por %p57, %p58
    %p61 = scmp.ne.s32.totalorder %s46, %s60
    %p62 = scmp.eq.s32.totalorder %s15, 0
    %p63 = por %p61, %p62
    %s65 = sadd.s32 %s64, 1
    %p68 = scmp.eq.s32.totalorder %s9, 1
    %p69 = scmp.ne.s32.totalorder %s64, %s66
    %p70 = scmp.eq.s32.totalorder %s9, 0
    %p71 = por %p69, %p70
    %p72 = scmp.ne.s32.totalorder %s64, %s66
    %p73 = scmp.eq.s32.totalorder %s14, 1
    %p74 = por %p72, %p73
    %p75 = scmp.ne.s32.totalorder %s66, %s67
    %p76 = scmp.eq.s32.totalorder %s14, 0
    %p77 = por %p75, %p76
    %p78 = scmp.ne.s32.totalorder %s66, %s67
    %p79 = scmp.eq.s32.totalorder %s15, 1
    %p80 = por %p78, %p79
    %p82 = scmp.ne.s32.totalorder %s67, %s81
    %p83 = scmp.eq.s32.totalorder %s15, 0
    %p84 = por %p82, %p83
    %s85 = ssub.s32 %s9, %s16
    %p86 = scmp.eq.s32.totalorder %s85, 0
    %s88 = sadd.s32 %s87, 1
    %s89 = scalar_select %p86, %s87, %s88
    %p92 = pneg %p86
    %p93 = scmp.eq.s32.totalorder %s9, 1
    %p94 = por %p92, %p93
    %p95 = scmp.ne.s32.totalorder %s87, %s90
    %p96 = scmp.eq.s32.totalorder %s9, 0
    %p97 = por %p95, %p96
    %p98 = scmp.ne.s32.totalorder %s87, %s90
    %p99 = scmp.eq.s32.totalorder %s14, 1
    %p100 = por %p98, %p99
    %p101 = scmp.ne.s32.totalorder %s90, %s91
    %p102 = scmp.eq.s32.totalorder %s14, 0
    %p103 = por %p101, %p102
    %p104 = scmp.ne.s32.totalorder %s90, %s91
    %p105 = scmp.eq.s32.totalorder %s15, 1
    %p106 = por %p104, %p105
    %p108 = scmp.ne.s32.totalorder %s91, %s107
    %p109 = scmp.eq.s32.totalorder %s15, 0
    %p110 = por %p108, %p109
    %p111 = scmp.le.s32.totalorder 1, %s9
    %p112 = scmp.lt.s32.totalorder %s9, 3
    %p113 = pnand %p111, %p112
    %p114 = pneg %p113
    // Predicated region
    $region9: #{tpu_custom_call.1} parent=5 // pred_check
      _
    $region10: #{tpu_custom_call.1} parent=5 // pred_check_branch
      %116 = sbr.rel (%p113) target = $region12
    $region11: #{tpu_custom_call.1} parent=5 // pred_region
      %s117 = ssub.s32 %s9, 1
      // Predicated region
      $region13: #{tpu_custom_call.1} parent=11 // pred_check
        %p118 = pneg %p56
      $region14: #{tpu_custom_call.1} parent=11 // pred_check_branch
        %120 = sbr.rel (%p118) target = $region16
      $region15: #{tpu_custom_call.1} parent=11 // pred_region
        _
      $region16: #{tpu_custom_call.1} parent=11 // pred_fallthru
        _
      // Predicated region
      $region17: #{tpu_custom_call.1} parent=11 // pred_check
        %p121 = pneg %p77
      $region18: #{tpu_custom_call.1} parent=11 // pred_check_branch
        %123 = sbr.rel (%p121) target = $region20
      $region19: #{tpu_custom_call.1} parent=11 // pred_region
        _
      $region20: #{tpu_custom_call.1} parent=11 // pred_fallthru
        _
    $region12: #{tpu_custom_call.1} parent=5 // pred_fallthru
      _
    %p124 = scmp.lt.s32.totalorder %s9, 2
    // Predicated region
    $region21: #{tpu_custom_call.1} parent=5 // pred_check
      %p125 = pneg %p124
    $region22: #{tpu_custom_call.1} parent=5 // pred_check_branch
      %127 = sbr.rel (%p125) target = $region24
    $region23: #{tpu_custom_call.1} parent=5 // pred_region
      // Predicated region
      $region25: #{tpu_custom_call.1} parent=23 // pred_check
        %p128 = pneg %p29
      $region26: #{tpu_custom_call.1} parent=23 // pred_check_branch
        %130 = sbr.rel (%p128) target = $region28
      $region27: #{tpu_custom_call.1} parent=23 // pred_region
        %p131 = scmp.lt.s32.totalorder %s9, 1
        %s132 = scalar_select %p131, %s9, 1
        %s133 = smul.addr %s132, 2
        %s134 = smul.addr %s133, 8
        %s135 = scalar_lea.vmem %s0, %s134
      $region28: #{tpu_custom_call.1} parent=23 // pred_fallthru
        _
    $region24: #{tpu_custom_call.1} parent=5 // pred_fallthru
      _
    %p136 = scmp.le.s32.totalorder 1, %s9
    %p137 = scmp.lt.s32.totalorder %s9, 3
    %p138 = pnand %p136, %p137
    %p139 = pneg %p138
    // Predicated region
    $region29: #{tpu_custom_call.1} parent=5 // pred_check
      _
    $region30: #{tpu_custom_call.1} parent=5 // pred_check_branch
      %141 = sbr.rel (%p138) target = $region32
    $region31: #{tpu_custom_call.1} parent=5 // pred_region
      %s142 = ssub.s32 %s9, 1
      %p143 = scmp.lt.s32.totalorder %s14, 1
      %s144 = scalar_select %p143, %s14, 1
      %s145 = smul.addr %s144, 2
      %s146 = smul.addr %s145, 8
      %s147 = scalar_lea.vmem %s0, %s146
      %p148 = pneg %p35
      %p149 = pneg %p32
      %p150 = pneg %p56
      %p151 = pneg %p53
      %p152 = pneg %p77
      %p153 = pneg %p74
      %p154 = pneg %p103
      %p155 = pneg %p100
      %p156 = scmp.lt.s32.totalorder %s14, 1
      %s157 = scalar_select %p156, %s14, 1
      %s158 = smul.addr %s157, 12
      %s159 = smul.addr %s158, 8
      %s160 = scalar_lea.vmem %s3, %s159
      %p161 = scmp.lt.s32.totalorder %s14, 1
      %s162 = scalar_select %p161, %s14, 1
      %s163 = smul.addr %s162, 2
      %s164 = smul.addr %s163, 8
      %s165 = scalar_lea.vmem %s0, %s164
      %p166 = scmp.lt.s32.totalorder %s14, 1
      %s167 = scalar_select %p166, %s14, 1
      %s168 = smul.addr %s167, 12
      %s169 = smul.addr %s168, 8
      %s170 = scalar_lea.vmem %s3, %s169
      %v171 = vld [vmem:[%s165] sm:$0xff]
      %v172 = vld [vmem:[%s165 + $0x8] sm:$0xff]
      %v173 = vld [vmem:[%s1] sm:$0xff]
      %v174 = vld [vmem:[%s1 + $0x8] sm:$0xff]
      %v175 = vld [vmem:[%s1 + $0x10] sm:$0xff]
      %v176 = vld [vmem:[%s1 + $0x18] sm:$0xff]
      %v177 = vld [vmem:[%s1 + $0x20] sm:$0xff]
      %v178 = vld [vmem:[%s1 + $0x28] sm:$0x3]
      %v179 = vld [vmem:[%s2] sm:$0xff]
      %v180 = vld [vmem:[%s2 + $0x8] sm:$0xff]
      %v181 = vld [vmem:[%s2 + $0x10] sm:$0xff]
      %v182 = vld [vmem:[%s2 + $0x18] sm:$0xff]
      %v183 = vld [vmem:[%s2 + $0x20] sm:$0xff]
      %v184 = vld [vmem:[%s2 + $0x28] sm:$0x3]
      %186 = vset.pattern.permute.xlu0 0
      %187 = vperm.xlu0 %186, %v179
      %v188 = vpop.permute.xlu0 %187
      %191 = vset.pattern.permute.xlu0 0
      %192 = vperm.xlu0 %191, %v180
      %v193 = vpop.permute.xlu0 %192
      %196 = vset.pattern.permute.xlu0 0
      %197 = vperm.xlu0 %196, %v181
      %v198 = vpop.permute.xlu0 %197
      %201 = vset.pattern.permute.xlu0 0
      %202 = vperm.xlu0 %201, %v182
      %v203 = vpop.permute.xlu0 %202
      %206 = vset.pattern.permute.xlu0 0
      %207 = vperm.xlu0 %206, %v183
      %v208 = vpop.permute.xlu0 %207
      %211 = vset.pattern.permute.xlu0 0
      %212 = vperm.xlu0 %211, %v184
      %v213 = vpop.permute.xlu0 %212
      %vm215 = vcmask 64512
      %v217 = vsel %vm215, %v173, 0
      %v220 = vsel %vm215, %v174, 0
      %v223 = vsel %vm215, %v175, 0
      %v226 = vsel %vm215, %v176, 0
      %v229 = vsel %vm215, %v177, 0
      %v232 = vsel %vm215, %v178, 0
      %234 = vmatprep.subr.mxu0 %v172
      %235 = vmatpush1.msra.mxu0 %v171
      %236 = vmatprep.subr.mxu0 0.0
      %237 = vmatpush1.msra.mxu0 0.0
      %238 = vmatprep.subr.mxu0 0.0
      %239 = vmatpush1.msra.mxu0 0.0
      %240 = vmatprep.subr.mxu0 0.0
      %241 = vmatpush1.msra.mxu0 0.0
      %242 = vmatprep.subr.mxu0 0.0
      %243 = vmatpush1.msra.mxu0 0.0
      %244 = vmatprep.subr.mxu0 0.0
      %245 = vmatpush1.msra.mxu0 0.0
      %246 = vmatprep.subr.mxu0 0.0
      %247 = vmatpush1.msra.mxu0 0.0
      %248 = vmatprep.subr.mxu0 0.0
      %249 = vmatpush1.msra.mxu0 0.0
      %250 = vmatprep.subr.mxu0 0.0
      %251 = vmatpush1.msra.mxu0 0.0
      %252 = vmatprep.subr.mxu0 0.0
      %253 = vmatpush1.msra.mxu0 0.0
      %254 = vmatprep.subr.mxu0 0.0
      %255 = vmatpush1.msra.mxu0 0.0
      %256 = vmatprep.subr.mxu0 0.0
      %257 = vmatpush1.msra.mxu0 0.0
      %258 = vmatprep.subr.mxu0 0.0
      %259 = vmatpush1.msra.mxu0 0.0
      %260 = vmatprep.subr.mxu0 0.0
      %261 = vmatpush1.msra.mxu0 0.0
      %262 = vmatprep.subr.mxu0 0.0
      %263 = vmatpush1.msra.mxu0 0.0
      %264 = vmatprep.subr.mxu0 0.0
      %265 = vmatpush1.msra.mxu0 0.0
      %266 = vmatprep.subr.mxu0 0.0
      %267 = vmatpush1.msra.mxu0 0.0
      %268 = vmatprep.subr.mxu0 0.0
      %269 = vmatpush1.msra.mxu0 0.0
      %270 = vmatprep.subr.mxu0 0.0
      %271 = vmatpush1.msra.mxu0 0.0
      %272 = vmatprep.subr.mxu0 0.0
      %273 = vmatpush1.msra.mxu0 0.0
      %274 = vmatprep.subr.mxu0 0.0
      %275 = vmatpush1.msra.mxu0 0.0
      %276 = vmatprep.subr.mxu0 0.0
      %277 = vmatpush1.msra.mxu0 0.0
      %278 = vmatprep.subr.mxu0 0.0
      %279 = vmatpush1.msra.mxu0 0.0
      %280 = vmatprep.subr.mxu0 0.0
      %281 = vmatpush1.msra.mxu0 0.0
      %282 = vmatprep.subr.mxu0 0.0
      %283 = vmatpush1.msra.mxu0 0.0
      %284 = vmatprep.subr.mxu0 0.0
      %285 = vmatpush1.msra.mxu0 0.0
      %286 = vmatprep.subr.mxu0 0.0
      %287 = vmatpush1.msra.mxu0 0.0
      %288 = vmatprep.subr.mxu0 0.0
      %289 = vmatpush1.msra.mxu0 0.0
      %290 = vmatprep.subr.mxu0 0.0
      %291 = vmatpush1.msra.mxu0 0.0
      %292 = vmatprep.subr.mxu0 0.0
      %293 = vmatpush1.msra.mxu0 0.0
      %294 = vmatprep.subr.mxu0 0.0
      %295 = vmatpush1.msra.mxu0 0.0
      %296 = vmatprep.subr.mxu0 0.0
      %297 = vmatpush1.msra.mxu0 0.0
      %298 = vmatprep.mubr.f32.mxu0 0.0
      %299 = vmatmul.mubr.f32.gmra.mrb[0].mxu0 %v217
      %v300 = vpop.f32.mrb[0].mxu0
      %v301 = vadd.f32 %v188, %v300
      %v302 = vpop.f32.mrb[0].mxu0
      %v303 = vadd.f32 %v188, %v302
      %304 = vmatprep.mubr.f32.mxu0 0.0
      %305 = vmatmul.mubr.f32.gmra.mrb[0].mxu0 %v220
      %v306 = vpop.f32.mrb[0].mxu0
      %v307 = vadd.f32 %v193, %v306
      %v308 = vpop.f32.mrb[0].mxu0
      %v309 = vadd.f32 %v193, %v308
      %310 = vmatprep.mubr.f32.mxu0 0.0
      %311 = vmatmul.mubr.f32.gmra.mrb[0].mxu0 %v223
      %v312 = vpop.f32.mrb[0].mxu0
      %v313 = vadd.f32 %v198, %v312
      %v314 = vpop.f32.mrb[0].mxu0
      %v315 = vadd.f32 %v198, %v314
      %316 = vmatprep.mubr.f32.mxu0 0.0
      %317 = vmatmul.mubr.f32.gmra.mrb[0].mxu0 %v226
      %v318 = vpop.f32.mrb[0].mxu0
      %v319 = vadd.f32 %v203, %v318
      %v320 = vpop.f32.mrb[0].mxu0
      %v321 = vadd.f32 %v203, %v320
      %322 = vmatprep.mubr.f32.mxu0 0.0
      %323 = vmatmul.mubr.f32.gmra.mrb[0].mxu0 %v229
      %v324 = vpop.f32.mrb[0].mxu0
      %v325 = vadd.f32 %v208, %v324
      %v326 = vpop.f32.mrb[0].mxu0
      %v327 = vadd.f32 %v208, %v326
      %328 = vmatprep.mubr.f32.mxu0 0.0
      %329 = vmatmul.mubr.f32.gmra.mrb[0].mxu0 %v232
      %v330 = vpop.f32.mrb[0].mxu0
      %v331 = vadd.f32 %v213, %v330
      %v332 = vpop.f32.mrb[0].mxu0
      %v333 = vadd.f32 %v213, %v332
      %334 = vdwg.mxu0
      %335 = vst [vmem:[%s170] sm:$0xff] %v301
      %336 = vst [vmem:[%s170 + $0x8] sm:$0xff] %v303
      %337 = vst [vmem:[%s170 + $0x10] sm:$0xff] %v307
      %338 = vst [vmem:[%s170 + $0x18] sm:$0xff] %v309
      %339 = vst [vmem:[%s170 + $0x20] sm:$0xff] %v313
      %340 = vst [vmem:[%s170 + $0x28] sm:$0xff] %v315
      %341 = vst [vmem:[%s170 + $0x30] sm:$0xff] %v319
      %342 = vst [vmem:[%s170 + $0x38] sm:$0xff] %v321
      %343 = vst [vmem:[%s170 + $0x40] sm:$0xff] %v325
      %344 = vst [vmem:[%s170 + $0x48] sm:$0xff] %v327
      %345 = vst [vmem:[%s170 + $0x50] sm:$0x3] %v331
      %346 = vst [vmem:[%s170 + $0x58] sm:$0x3] %v333
      %p347 = scmp.lt.s32.totalorder %s14, 1
      %s348 = scalar_select %p347, %s14, 1
      %s349 = smul.addr %s348, 12
      %s350 = smul.addr %s349, 8
      %s351 = scalar_lea.vmem %s3, %s350
      // Predicated region
      $region33: #{tpu_custom_call.1} parent=31 // pred_check
        %p352 = pneg %p100
      $region34: #{tpu_custom_call.1} parent=31 // pred_check_branch
        %354 = sbr.rel (%p352) target = $region36
      $region35: #{tpu_custom_call.1} parent=31 // pred_region
        _
      $region36: #{tpu_custom_call.1} parent=31 // pred_fallthru
        _
    $region32: #{tpu_custom_call.1} parent=5 // pred_fallthru
      _
    %p355 = scmp.le.s32.totalorder 2, %s9
    // Predicated region
    $region37: #{tpu_custom_call.1} parent=5 // pred_check
      %p356 = pneg %p355
    $region38: #{tpu_custom_call.1} parent=5 // pred_check_branch
      %358 = sbr.rel (%p356) target = $region40
    $region39: #{tpu_custom_call.1} parent=5 // pred_region
      %s359 = ssub.s32 %s9, 2
      // Predicated region
      $region41: #{tpu_custom_call.1} parent=39 // pred_check
        %p360 = pneg %p106
      $region42: #{tpu_custom_call.1} parent=39 // pred_check_branch
        %362 = sbr.rel (%p360) target = $region44
      $region43: #{tpu_custom_call.1} parent=39 // pred_region
        %p363 = scmp.lt.s32.totalorder %s15, 1
        %s364 = scalar_select %p363, %s15, 1
        %s365 = smul.addr %s364, 12
        %s366 = smul.addr %s365, 8
        %s367 = scalar_lea.vmem %s3, %s366
      $region44: #{tpu_custom_call.1} parent=39 // pred_fallthru
        _
    $region40: #{tpu_custom_call.1} parent=5 // pred_fallthru
      _
  $region6: #{tpu_custom_call.1} parent=0 // loop_footer
    %s13 = sadd.s32 1, %s9
  $region7: #{tpu_custom_call.1} parent=0 // loop_footer_branch
    %8 = sbr.rel target = $region3
  $region8: #{tpu_custom_call.1} parent=0 // loop_exit
    _

</llo_original>
